<compile_context>
chip_gen: v7x
topology: tpu7x:2x2x1
jax: 0.10.0
libtpu: 0.0.40
codegen_flags: <defaults>
</compile_context>

<pallas_src>
import functools

import jax
import jax.numpy as jnp
from jax import lax
from jax.experimental import pallas as pl
from jax.experimental.pallas import tpu as pltpu

EPS = 1e-5


# ----------------------------------------------------------------------------
# Kernels
# ----------------------------------------------------------------------------
def _add_ln_kernel(eps, n_inputs, *refs):
    """Plain path: normalize over the (full) last axis of the block."""
    x_refs = refs[:n_inputs]
    g_ref, b_ref, o_ref = refs[n_inputs], refs[n_inputs + 1], refs[n_inputs + 2]

    # Skip-connection add, accumulated in fp32.
    s = x_refs[0][...].astype(jnp.float32)
    for r in x_refs[1:]:
        s = s + r[...].astype(jnp.float32)

    # Biased variance (matches torch.nn.LayerNorm), centered two-pass form.
    # TODO(synk): on v5e with bf16/int8 inputs and n>=3 a one-pass
    # sum/sum-of-squares variant would cut VALU work -- only adopt if a bundle
    # dump shows VALU/XLU saturation.
    mean = jnp.mean(s, axis=-1, keepdims=True)
    centered = s - mean
    var = jnp.mean(centered * centered, axis=-1, keepdims=True)
    inv = lax.rsqrt(var + eps)
    out = centered * inv * g_ref[...] + b_ref[...]
    o_ref[...] = out.astype(o_ref.dtype)


def _group_mean(x, p_bf16):
    """Per-group mean of x (rows, 128) via the (idle) MXU.

    p_bf16 is a (128, 128) block-diagonal matrix holding 1/H in each HxH block,
    so `x @ p` broadcasts every group's mean to all lanes of that group.  x is
    split into three bf16 terms (compensated summation) so the result is
    f32-accurate regardless of the default f32-matmul precision.
    """
    x1 = x.astype(jnp.bfloat16)
    r1 = x - x1.astype(jnp.float32)
    x2 = r1.astype(jnp.bfloat16)
    x3 = (r1 - x2.astype(jnp.float32)).astype(jnp.bfloat16)
    out = jnp.dot(x1, p_bf16, preferred_element_type=jnp.float32)
    out = out + jnp.dot(x2, p_bf16, preferred_element_type=jnp.float32)
    out = out + jnp.dot(x3, p_bf16, preferred_element_type=jnp.float32)
    return out


def _add_ln_packed_kernel(eps, n_inputs, *refs):
    """Packed path: k logical rows per 128-lane row; grouped LayerNorm."""
    x_refs = refs[:n_inputs]
    g_ref = refs[n_inputs]
    b_ref = refs[n_inputs + 1]
    p_ref = refs[n_inputs + 2]
    o_ref = refs[n_inputs + 3]

    s = x_refs[0][...].astype(jnp.float32)
    for r in x_refs[1:]:
        s = s + r[...].astype(jnp.float32)

    p = p_ref[...]
    mean = _group_mean(s, p)
    centered = s - mean
    var = _group_mean(centered * centered, p)
    inv = lax.rsqrt(var + eps)
    out = centered * inv * g_ref[...] + b_ref[...]
    o_ref[...] = out.astype(o_ref.dtype)


# ----------------------------------------------------------------------------
# Sizing helpers
# ----------------------------------------------------------------------------
def _round_up(x, m):
    return ((x + m - 1) // m) * m


def _sublane_pack(dtype):
    # Rows per fully-packed vreg sublane group: 8 (32-bit), 16 (16-bit), 32 (8-bit).
    bits = jnp.dtype(dtype).itemsize * 8
    return max(8, 256 // bits)


def _vmem_capacity_bytes():
    """Generation-aware per-core VMEM capacity with a sane fallback."""
    cap = None
    try:
        cap = int(pltpu.get_tpu_info().vmem_capacity_bytes)
    except Exception:
        cap = None
    try:
        kind = jax.devices()[0].device_kind.lower()
    except Exception:
        kind = ""
    if cap is None or cap <= 0:
        # Detect generation instead of silently defaulting to 64 MiB.
        cap = (64 << 20) if "v7" in kind else (128 << 20)
    if "v7" in kind:
        cap = min(cap, 64 << 20)  # v7x VMEM is 64 MiB per TensorCore.
    return cap


def _pick_block_rows(Mk, W, n_inputs, itemsize, pack, vmem_bytes):
    """Rows per block for a (Mk, W) kernel-view array."""
    # Bytes-based tile target (~2 MiB per input tile): grows rows for small W,
    # keeps large-W tiles bounded; measured pipeline efficiency saturates past
    # ~0.5-2 MiB tiles.
    target_tile_bytes = 2 << 20
    br_target = max(pack, target_tile_bytes // (W * itemsize))

    # VMEM budget: (n inputs + 1 output) double-buffered tiles plus ~6 fp32
    # tiles of in-kernel temporaries, against ~50% of per-core VMEM.
    per_row = (n_inputs + 1) * 2 * W * itemsize + 6 * W * 4
    br_vmem = max(pack, int(vmem_bytes * 0.5) // per_row)

    br = min(br_target, br_vmem)
    br = max(pack, (br // pack) * pack)

    # Guarantee multiple grid steps (>=2, ideally >=4) so v7x's 2 TensorCores
    # both get work from the "parallel" row axis.
    if Mk >= 4 * pack:
        br = min(br, max(pack, (pl.cdiv(Mk, 4) // pack) * pack))
    elif Mk >= 2 * pack:
        br = min(br, max(pack, (pl.cdiv(Mk, 2) // pack) * pack))

    br = min(br, _round_up(Mk, pack))
    if pl.cdiv(Mk, br) <= 1:
        br = Mk  # single exact block for tiny inputs (block == array shape)
    return int(br)


# ----------------------------------------------------------------------------
# Wrapper
# ----------------------------------------------------------------------------
def add_and_norm(x_list, gamma, beta, *, block_rows=None, eps=EPS):
    """Sum the tensors in x_list, then LayerNorm over the last dim (fused)."""
    n = len(x_list)
    x0 = x_list[0]
    orig_shape = x0.shape
    H = orig_shape[-1]
    M = 1
    for d in orig_shape[:-1]:
        M *= d

    dtype = x0.dtype
    itemsize = jnp.dtype(dtype).itemsize
    pack = _sublane_pack(dtype)
    vmem_bytes = _vmem_capacity_bytes()

    # Lane packing: k logical rows per 128-lane kernel row when H divides 128.
    k = 128 // H if (H < 128 and 128 % H == 0) else 1
    use_pack = (k > 1) and (M % k == 0)
    if not use_pack:
        k = 1
    # TODO(synk): H that is neither a multiple of 128 nor evenly packable (or
    # M % k != 0) falls back to a lane-sparse layout; a general row-repack
    # scheme would improve lane utilization there.

    W = k * H      # lane width seen by the kernel
    Mk = M // k    # rows seen by the kernel

    # Contiguous reshapes only -- no padding, no extra HBM copies.
    xs = [x.reshape(Mk, W) for x in x_list]

    gamma32 = gamma.astype(jnp.float32)
    beta32 = beta.astype(jnp.float32)
    if use_pack:
        g2 = jnp.tile(gamma32, k).reshape(1, W)
        b2 = jnp.tile(beta32, k).reshape(1, W)
        grp = jnp.arange(W, dtype=jnp.int32) // H
        # Block-diagonal averaging matrix; 1/H exact in bf16 (H is a power of 2).
        pmat = jnp.where(grp[:, None] == grp[None, :], 1.0 / H, 0.0).astype(jnp.bfloat16)
        params = (g2, b2, pmat)
        kernel = functools.partial(_add_ln_packed_kernel, float(eps), n)
    else:
        g2 = gamma32.reshape(1, W)
        b2 = beta32.reshape(1, W)
        params = (g2, b2)
        kernel = functools.partial(_add_ln_kernel, float(eps), n)

    if block_rows is None:
        block_rows = _pick_block_rows(Mk, W, n, itemsize, pack, vmem_bytes)
    block_rows = int(block_rows)

    grid = (pl.cdiv(Mk, block_rows),)

    # Row-tiled, pipelined inputs/output (lane-dense when packing applies).
    # TODO(synk): for very small tiles, sweeping pipeline_mode=pl.Buffered(3)
    # may hide DMA issue latency further -- only keep if it measures.
    row_spec = pl.BlockSpec((block_rows, W), lambda i: (i, 0))
    # gamma/beta/averaging-matrix: whole-array VMEM residency (loaded once,
    # outside the per-grid-step pipelined stream).
    param_spec = pl.BlockSpec(memory_space=pltpu.MemorySpace.VMEM)

    # VMEM limit sized to the actual tiles + fp32 temporaries + resident params.
    tile_bytes = (n + 1) * 2 * block_rows * W * itemsize
    interm_bytes = 6 * block_rows * W * 4
    param_bytes = sum(int(p.size) for p in params) * 4
    vmem_limit = tile_bytes + interm_bytes + param_bytes + (8 << 20)
    vmem_limit = int(min(max(vmem_limit, 32 << 20), int(vmem_bytes * 0.85)))

    matmul_flops = 6 * 2 * Mk * W * W if use_pack else 0
    cost = pl.CostEstimate(
        flops=int((n + 7) * M * H + matmul_flops),
        transcendentals=int(M),
        bytes_accessed=int((n + 1) * M * H * itemsize + param_bytes),
    )

    out = pl.pallas_call(
        kernel,
        out_shape=jax.ShapeDtypeStruct((Mk, W), dtype),
        grid_spec=pltpu.PrefetchScalarGridSpec(
            num_scalar_prefetch=0,
            grid=grid,
            in_specs=[row_spec] * n + [param_spec] * len(params),
            out_specs=row_spec,
        ),
        compiler_params=pltpu.CompilerParams(
            dimension_semantics=("parallel",),  # shard rows across TCs on v7x
            vmem_limit_bytes=vmem_limit,
        ),
        cost_estimate=cost,
    )(*xs, *params)

    return out.reshape(orig_shape)


def _reference(x_list, gamma, beta, eps=EPS):
    s = x_list[0]
    for x in x_list[1:]:
        s = s + x
    mean = jnp.mean(s, axis=-1, keepdims=True)
    var = jnp.mean((s - mean) ** 2, axis=-1, keepdims=True)
    return (s - mean) / jnp.sqrt(var + eps) * gamma + beta


if __name__ == "__main__":
    key = jax.random.PRNGKey(0)

    # Case 1: norm_size=32 (packed lane-dense path), 2-way skip connection.
    B, S, H = 2, 8, 32
    k1, k2 = jax.random.split(key)
    x0 = jax.random.normal(k1, (B, S, H), dtype=jnp.float32)
    x1 = jax.random.normal(k2, (B, S, H), dtype=jnp.float32)
    # nn.LayerNorm default init: weight = ones, bias = zeros.
    gamma = jnp.ones((H,), dtype=jnp.float32)
    beta = jnp.zeros((H,), dtype=jnp.float32)

    out = jax.block_until_ready(add_and_norm([x0, x1], gamma, beta))
    ref = _reference([x0, x1], gamma, beta)
    assert out.shape == (B, S, H)
    assert jnp.allclose(out, ref, atol=5e-5, rtol=5e-5), "mismatch (packed path)"

    # Case 2: norm_size=128 (plain lane-dense path), 3-way add, ragged rows
    # (exercises the pad-free partial tail block).
    B2, S2, H2 = 1, 20, 128
    ks = jax.random.split(key, 3)
    ys = [jax.random.normal(kk, (B2, S2, H2), dtype=jnp.float32) for kk in ks]
    g2 = 1.0 + 0.1 * jax.random.normal(jax.random.PRNGKey(1), (H2,), dtype=jnp.float32)
    b2 = 0.1 * jax.random.normal(jax.random.PRNGKey(2), (H2,), dtype=jnp.float32)

    out2 = jax.block_until_ready(add_and_norm(ys, g2, b2))
    ref2 = _reference(ys, g2, b2)
    assert out2.shape == (B2, S2, H2)
    assert jnp.allclose(out2, ref2, atol=5e-5, rtol=5e-5), "mismatch (plain path)"

    print("KERNEL_OK")
</pallas_src>

<mosaic_0001>
module attributes {stable_mosaic.version = 11 : i64} {
  func.func @_add_ln_packed_kernel(%arg0: i32, %arg1: memref<4x128xf32, #tpu.memory_space<vmem>>, %arg2: memref<4x128xf32, #tpu.memory_space<vmem>>, %arg3: memref<1x128xf32, #tpu.memory_space<vmem>>, %arg4: memref<1x128xf32, #tpu.memory_space<vmem>>, %arg5: memref<128x128xbf16, #tpu.memory_space<vmem>>, %arg6: memref<4x128xf32, #tpu.memory_space<vmem>>) attributes {dimension_semantics = [#tpu.dimension_semantics<parallel>], iteration_bounds = array<i64: 1>, scalar_prefetch = 0 : i64, scratch_operands = 0 : i64, tpu.core_type = #tpu.core_type<tc>, window_params = [{transform_indices = @transform_0, window_bounds = array<i64: 4, 128>}, {transform_indices = @transform_1, window_bounds = array<i64: 4, 128>}, {pipeline_mode = #tpu.pipeline_mode<synchronous>, transform_indices = @transform_2, window_bounds = array<i64: 1, 128>}, {pipeline_mode = #tpu.pipeline_mode<synchronous>, transform_indices = @transform_3, window_bounds = array<i64: 1, 128>}, {pipeline_mode = #tpu.pipeline_mode<synchronous>, transform_indices = @transform_4, window_bounds = array<i64: 128, 128>}, {transform_indices = @transform_5, window_bounds = array<i64: 4, 128>}]} {
    %c0 = arith.constant 0 : index
    %c0_0 = arith.constant 0 : index
    %0 = vector.load %arg1[%c0, %c0_0] : memref<4x128xf32, #tpu.memory_space<vmem>>, vector<4x128xf32>
    %c0_1 = arith.constant 0 : index
    %c0_2 = arith.constant 0 : index
    %1 = vector.load %arg2[%c0_1, %c0_2] : memref<4x128xf32, #tpu.memory_space<vmem>>, vector<4x128xf32>
    %2 = arith.addf %0, %1 : vector<4x128xf32>
    %c0_3 = arith.constant 0 : index
    %c0_4 = arith.constant 0 : index
    %3 = vector.load %arg5[%c0_3, %c0_4] : memref<128x128xbf16, #tpu.memory_space<vmem>>, vector<128x128xbf16>
    %4 = arith.truncf %2 : vector<4x128xf32> to vector<4x128xbf16>
    %5 = arith.extf %4 : vector<4x128xbf16> to vector<4x128xf32>
    %6 = arith.subf %2, %5 : vector<4x128xf32>
    %7 = arith.truncf %6 : vector<4x128xf32> to vector<4x128xbf16>
    %8 = arith.extf %7 : vector<4x128xbf16> to vector<4x128xf32>
    %9 = arith.subf %6, %8 : vector<4x128xf32>
    %10 = arith.truncf %9 : vector<4x128xf32> to vector<4x128xbf16>
    %cst = arith.constant dense<0.000000e+00> : vector<4x128xf32>
    %11 = tpu.matmul %4, %3, %cst {dimension_numbers = #tpu.dot_dimension_numbers<[1], [0], [0], [1], [0, 0, 1, 1], [], []>} : vector<4x128xbf16>, vector<128x128xbf16>, vector<4x128xf32> -> vector<4x128xf32>
    %cst_5 = arith.constant dense<0.000000e+00> : vector<4x128xf32>
    %12 = tpu.matmul %7, %3, %cst_5 {dimension_numbers = #tpu.dot_dimension_numbers<[1], [0], [0], [1], [0, 0, 1, 1], [], []>} : vector<4x128xbf16>, vector<128x128xbf16>, vector<4x128xf32> -> vector<4x128xf32>
    %13 = arith.addf %11, %12 : vector<4x128xf32>
    %cst_6 = arith.constant dense<0.000000e+00> : vector<4x128xf32>
    %14 = tpu.matmul %10, %3, %cst_6 {dimension_numbers = #tpu.dot_dimension_numbers<[1], [0], [0], [1], [0, 0, 1, 1], [], []>} : vector<4x128xbf16>, vector<128x128xbf16>, vector<4x128xf32> -> vector<4x128xf32>
    %15 = arith.addf %13, %14 : vector<4x128xf32>
    %16 = arith.subf %2, %15 : vector<4x128xf32>
    %17 = arith.mulf %16, %16 : vector<4x128xf32>
    %18 = arith.truncf %17 : vector<4x128xf32> to vector<4x128xbf16>
    %19 = arith.extf %18 : vector<4x128xbf16> to vector<4x128xf32>
    %20 = arith.subf %17, %19 : vector<4x128xf32>
    %21 = arith.truncf %20 : vector<4x128xf32> to vector<4x128xbf16>
    %22 = arith.extf %21 : vector<4x128xbf16> to vector<4x128xf32>
    %23 = arith.subf %20, %22 : vector<4x128xf32>
    %24 = arith.truncf %23 : vector<4x128xf32> to vector<4x128xbf16>
    %cst_7 = arith.constant dense<0.000000e+00> : vector<4x128xf32>
    %25 = tpu.matmul %18, %3, %cst_7 {dimension_numbers = #tpu.dot_dimension_numbers<[1], [0], [0], [1], [0, 0, 1, 1], [], []>} : vector<4x128xbf16>, vector<128x128xbf16>, vector<4x128xf32> -> vector<4x128xf32>
    %cst_8 = arith.constant dense<0.000000e+00> : vector<4x128xf32>
    %26 = tpu.matmul %21, %3, %cst_8 {dimension_numbers = #tpu.dot_dimension_numbers<[1], [0], [0], [1], [0, 0, 1, 1], [], []>} : vector<4x128xbf16>, vector<128x128xbf16>, vector<4x128xf32> -> vector<4x128xf32>
    %27 = arith.addf %25, %26 : vector<4x128xf32>
    %cst_9 = arith.constant dense<0.000000e+00> : vector<4x128xf32>
    %28 = tpu.matmul %24, %3, %cst_9 {dimension_numbers = #tpu.dot_dimension_numbers<[1], [0], [0], [1], [0, 0, 1, 1], [], []>} : vector<4x128xbf16>, vector<128x128xbf16>, vector<4x128xf32> -> vector<4x128xf32>
    %29 = arith.addf %27, %28 : vector<4x128xf32>
    %cst_10 = arith.constant 9.99999974E-6 : f32
    %30 = vector.broadcast %cst_10 : f32 to vector<4x128xf32>
    %31 = arith.addf %29, %30 : vector<4x128xf32>
    %32 = math.rsqrt %31 : vector<4x128xf32>
    %33 = arith.mulf %16, %32 : vector<4x128xf32>
    %c0_11 = arith.constant 0 : index
    %c0_12 = arith.constant 0 : index
    %34 = vector.load %arg3[%c0_11, %c0_12] : memref<1x128xf32, #tpu.memory_space<vmem>>, vector<1x128xf32>
    %35 = vector.broadcast %34 : vector<1x128xf32> to vector<4x128xf32>
    %36 = arith.mulf %33, %35 : vector<4x128xf32>
    %c0_13 = arith.constant 0 : index
    %c0_14 = arith.constant 0 : index
    %37 = vector.load %arg4[%c0_13, %c0_14] : memref<1x128xf32, #tpu.memory_space<vmem>>, vector<1x128xf32>
    %38 = vector.broadcast %37 : vector<1x128xf32> to vector<4x128xf32>
    %39 = arith.addf %36, %38 : vector<4x128xf32>
    %c0_15 = arith.constant 0 : index
    %c0_16 = arith.constant 0 : index
    %40 = vector.load %arg6[%c0_15, %c0_16] : memref<4x128xf32, #tpu.memory_space<vmem>>, vector<4x128xf32>
    tpu.vector_store %arg6[%c0_15, %c0_16], %39 {strides = array<i32>} : memref<4x128xf32, #tpu.memory_space<vmem>>, vector<4x128xf32>,
    return
  }
  func.func @transform_0(%arg0: i32) -> (i32, i32) {
    %c0_i32 = arith.constant 0 : i32
    %c0_i32_0 = arith.constant 0 : i32
    return %arg0, %c0_i32 : i32, i32
  }
  func.func @transform_1(%arg0: i32) -> (i32, i32) {
    %c0_i32 = arith.constant 0 : i32
    %c0_i32_0 = arith.constant 0 : i32
    return %arg0, %c0_i32 : i32, i32
  }
  func.func @transform_2(%arg0: i32) -> (i32, i32) {
    %c0_i32 = arith.constant 0 : i32
    %c0_i32_0 = arith.constant 0 : i32
    %c0_i32_1 = arith.constant 0 : i32
    return %c0_i32, %c0_i32_0 : i32, i32
  }
  func.func @transform_3(%arg0: i32) -> (i32, i32) {
    %c0_i32 = arith.constant 0 : i32
    %c0_i32_0 = arith.constant 0 : i32
    %c0_i32_1 = arith.constant 0 : i32
    return %c0_i32, %c0_i32_0 : i32, i32
  }
  func.func @transform_4(%arg0: i32) -> (i32, i32) {
    %c0_i32 = arith.constant 0 : i32
    %c0_i32_0 = arith.constant 0 : i32
    %c0_i32_1 = arith.constant 0 : i32
    return %c0_i32, %c0_i32_0 : i32, i32
  }
  func.func @transform_5(%arg0: i32) -> (i32, i32) {
    %c0_i32 = arith.constant 0 : i32
    %c0_i32_0 = arith.constant 0 : i32
    return %arg0, %c0_i32 : i32, i32
  }
}

</mosaic_0001>

<llo_original>
// kernel: tpu_custom_call.1
$region0: #{tpu_custom_call.1}
  #allocation0 [shape = 'u32[]', space=smem, size = 0x4, offset = 0x4, fixed_abs, tag = 'smem constant byte address 0x4 - core index']
  #allocation1 [shape = 'u32[144,128]{1,0:T(1,128)}', space=vmem, size = 0x12000, scoped, tag = 'internal scratch']
  %s0 = inlined_call_operand.hbm [shape: f32[4,128], index: 0, kind: input, shape index: {}]
  %s1 = inlined_call_operand.hbm [shape: f32[4,128], index: 1, kind: input, shape index: {}]
  %s2 = inlined_call_operand.vmem [shape: f32[1,128], index: 2, kind: input, shape index: {}]
  %s3 = inlined_call_operand.vmem [shape: f32[1,128], index: 3, kind: input, shape index: {}]
  %s4 = inlined_call_operand.hbm [shape: bf16[128,128], index: 4, kind: input, shape index: {}]
  %s5 = inlined_call_operand.hbm [shape: f32[4,128], index: 5, kind: output, shape index: {}]
  %s6 = sld [smem:[#allocation0]]
  $region42: #{tpu_custom_call.1} parent=0
    _
  %s8 = ssub.s32 1, %s6
  %s9 = scalar_select 0, %s8, %s6
  $region1: #{tpu_custom_call.1} parent=0
    #allocation2 [shape = 'u8[2048]{0}', space=vmem, size = 0x800, scoped, tag = 'input window, operand 0, single buffered']
    #allocation3 [shape = 's32[1]{0}', space=sflag, size = 0x4, scoped, tag = 'scoped memory for tpu_custom_call.1']
    #allocation4 [shape = 's32[1]{0}', space=sflag, size = 0x4, scoped, tag = 'scoped memory for tpu_custom_call.1']
    #allocation5 [shape = 'u8[2048]{0}', space=vmem, size = 0x800, scoped, tag = 'input window, operand 1, single buffered']
    #allocation6 [shape = 's32[1]{0}', space=sflag, size = 0x4, scoped, tag = 'scoped memory for tpu_custom_call.1']
    #allocation7 [shape = 'u8[32768]{0}', space=vmem, size = 0x8000, scoped, tag = 'input window, operand 4, single buffered']
    #allocation8 [shape = 'u8[2048]{0}', space=vmem, size = 0x800, scoped, tag = 'output window, operand 0, single buffered']
    %10 = vsyncpa [#allocation3], 0
    %11 = vsyncpa [#allocation6], 0
    %12 = vsyncpa [#allocation4], 0
    // Predicated region
    $region2: #{tpu_custom_call.1} parent=1 // pred_check
      _
    $region3: #{tpu_custom_call.1} parent=1 // pred_check_branch
      %14 = sbr.rel (0) target = $region5
    $region4: #{tpu_custom_call.1} parent=1 // pred_region
      %s16 = ssub.s32 64, 64
      %17 = vsyncadd [#allocation3], %s16
      %s19 = sshll.u32 [#allocation2], 4
      %s20 = int_to_ptr.vmem [resolvable:$true] %s19
      %22 = dma.hbm_to_vmem [thread:$0]  %s0, 64, %s20, [#allocation3]
    $region5: #{tpu_custom_call.1} parent=1 // pred_fallthru
      _
    // Predicated region
    $region6: #{tpu_custom_call.1} parent=1 // pred_check
      _
    $region7: #{tpu_custom_call.1} parent=1 // pred_check_branch
      %24 = sbr.rel (0) target = $region9
    $region8: #{tpu_custom_call.1} parent=1 // pred_region
      %s26 = ssub.s32 64, 64
      %27 = vsyncadd [#allocation6], %s26
      %s29 = sshll.u32 [#allocation5], 4
      %s30 = int_to_ptr.vmem [resolvable:$true] %s29
      %32 = dma.hbm_to_vmem [thread:$0]  %s1, 64, %s30, [#allocation6]
    $region9: #{tpu_custom_call.1} parent=1 // pred_fallthru
      _
    // Predicated region
    $region10: #{tpu_custom_call.1} parent=1 // pred_check
      _
    $region11: #{tpu_custom_call.1} parent=1 // pred_check_branch
      %34 = sbr.rel (0) target = $region13
    $region12: #{tpu_custom_call.1} parent=1 // pred_region
      _
    $region13: #{tpu_custom_call.1} parent=1 // pred_fallthru
      _
    // Predicated region
    $region14: #{tpu_custom_call.1} parent=1 // pred_check
      _
    $region15: #{tpu_custom_call.1} parent=1 // pred_check_branch
      %36 = sbr.rel (0) target = $region17
    $region16: #{tpu_custom_call.1} parent=1 // pred_region
      _
    $region17: #{tpu_custom_call.1} parent=1 // pred_fallthru
      _
    // Predicated region
    $region18: #{tpu_custom_call.1} parent=1 // pred_check
      _
    $region19: #{tpu_custom_call.1} parent=1 // pred_check_branch
      %38 = sbr.rel (0) target = $region21
    $region20: #{tpu_custom_call.1} parent=1 // pred_region
      %s40 = ssub.s32 1024, 1024
      %41 = vsyncadd [#allocation6], %s40
      %s42 = sshll.u32 [#allocation7], 4
      %s43 = int_to_ptr.vmem [resolvable:$true] %s42
      %48 = dma.hbm_to_vmem [thread:$0]  %s4, 1024, %s43, [#allocation6], 64, 64, 4
    $region21: #{tpu_custom_call.1} parent=1 // pred_fallthru
      _
    // Predicated region
    $region22: #{tpu_custom_call.1} parent=1 // pred_check
      _
    $region23: #{tpu_custom_call.1} parent=1 // pred_check_branch
      %50 = sbr.rel (0) target = $region25
    $region24: #{tpu_custom_call.1} parent=1 // pred_region
      %51 = dma.done [#allocation3], 64
    $region25: #{tpu_custom_call.1} parent=1 // pred_fallthru
      _
    // Predicated region
    $region26: #{tpu_custom_call.1} parent=1 // pred_check
      _
    $region27: #{tpu_custom_call.1} parent=1 // pred_check_branch
      %53 = sbr.rel (0) target = $region29
    $region28: #{tpu_custom_call.1} parent=1 // pred_region
      %54 = dma.done [#allocation6], 64
    $region29: #{tpu_custom_call.1} parent=1 // pred_fallthru
      _
    // Predicated region
    $region30: #{tpu_custom_call.1} parent=1 // pred_check
      _
    $region31: #{tpu_custom_call.1} parent=1 // pred_check_branch
      %56 = sbr.rel (0) target = $region33
    $region32: #{tpu_custom_call.1} parent=1 // pred_region
      %57 = dma.done [#allocation6], 1024
    $region33: #{tpu_custom_call.1} parent=1 // pred_fallthru
      _
    %v59 = vld [vmem:[#allocation2] sm:$0xf]
    %v60 = vld [vmem:[#allocation5] sm:$0xf]
    %v61 = vadd.f32 %v59, %v60
    %v62 = vld [vmem:[#allocation7] sm:$0xf]
    %v63 = vld [vmem:[#allocation7 + $0x4] sm:$0xf]
    %v64 = vld [vmem:[#allocation7 + $0x8] sm:$0xf]
    %v65 = vld [vmem:[#allocation7 + $0xc] sm:$0xf]
    %v66 = vld [vmem:[#allocation7 + $0x10] sm:$0xf]
    %v67 = vld [vmem:[#allocation7 + $0x14] sm:$0xf]
    %v68 = vld [vmem:[#allocation7 + $0x18] sm:$0xf]
    %v69 = vld [vmem:[#allocation7 + $0x1c] sm:$0xf]
    %v70 = vld [vmem:[#allocation7 + $0x20] sm:$0xf]
    %v71 = vld [vmem:[#allocation7 + $0x24] sm:$0xf]
    %v72 = vld [vmem:[#allocation7 + $0x28] sm:$0xf]
    %v73 = vld [vmem:[#allocation7 + $0x2c] sm:$0xf]
    %v74 = vld [vmem:[#allocation7 + $0x30] sm:$0xf]
    %v75 = vld [vmem:[#allocation7 + $0x34] sm:$0xf]
    %v76 = vld [vmem:[#allocation7 + $0x38] sm:$0xf]
    %v77 = vld [vmem:[#allocation7 + $0x3c] sm:$0xf]
    %v78 = vpack.c.bf16 %v61, %v61
    %v79 = vunpack.c.l.bf16 %v78
    %v80 = vsub.f32 %v61, %v79
    %v81 = vpack.c.bf16 %v80, %v80
    %v82 = vunpack.c.l.bf16 %v81
    %v83 = vsub.f32 %v80, %v82
    %v84 = vpack.c.bf16 %v83, %v83
    %v101 = vunpack.c.l.b16 %v62
    %v102 = vunpack.c.l.b16 %v63
    %v103 = vunpack.c.l.b16 %v64
    %v104 = vunpack.c.l.b16 %v65
    %v105 = vunpack.c.l.b16 %v66
    %v106 = vunpack.c.l.b16 %v67
    %v107 = vunpack.c.l.b16 %v68
    %v108 = vunpack.c.l.b16 %v69
    %v109 = vunpack.c.l.b16 %v70
    %v110 = vunpack.c.l.b16 %v71
    %v111 = vunpack.c.l.b16 %v72
    %v112 = vunpack.c.l.b16 %v73
    %v113 = vunpack.c.l.b16 %v74
    %v114 = vunpack.c.l.b16 %v75
    %v115 = vunpack.c.l.b16 %v76
    %v116 = vunpack.c.l.b16 %v77
    %v117 = vpack.c.b16 %v102, %v101
    %v118 = vpack.c.b16 %v104, %v103
    %v119 = vpack.c.b16 %v106, %v105
    %v120 = vpack.c.b16 %v108, %v107
    %v121 = vpack.c.b16 %v110, %v109
    %v122 = vpack.c.b16 %v112, %v111
    %v123 = vpack.c.b16 %v114, %v113
    %v124 = vpack.c.b16 %v116, %v115
    %133 = vmatprep.subr.bf16.mxu0 0
    %134 = vmatpush1.bf16.msra.mxu0 %v117
    %135 = vmatprep.subr.bf16.mxu0 0
    %136 = vmatpush1.bf16.msra.mxu0 %v118
    %137 = vmatprep.subr.bf16.mxu0 0
    %138 = vmatpush1.bf16.msra.mxu0 %v119
    %139 = vmatprep.subr.bf16.mxu0 0
    %140 = vmatpush1.bf16.msra.mxu0 %v120
    %141 = vmatprep.subr.bf16.mxu0 0
    %142 = vmatpush1.bf16.msra.mxu0 %v121
    %143 = vmatprep.subr.bf16.mxu0 0
    %144 = vmatpush1.bf16.msra.mxu0 %v122
    %145 = vmatprep.subr.bf16.mxu0 0
    %146 = vmatpush1.bf16.msra.mxu0 %v123
    %147 = vmatprep.subr.bf16.mxu0 0
    %148 = vmatpush1.bf16.msra.mxu0 %v124
    %149 = vmatprep.subr.bf16.mxu0 0
    %150 = vmatpush1.bf16.msra.mxu0 0
    %151 = vmatprep.subr.bf16.mxu0 0
    %152 = vmatpush1.bf16.msra.mxu0 0
    %153 = vmatprep.subr.bf16.mxu0 0
    %154 = vmatpush1.bf16.msra.mxu0 0
    %155 = vmatprep.subr.bf16.mxu0 0
    %156 = vmatpush1.bf16.msra.mxu0 0
    %157 = vmatprep.subr.bf16.mxu0 0
    %158 = vmatpush1.bf16.msra.mxu0 0
    %159 = vmatprep.subr.bf16.mxu0 0
    %160 = vmatpush1.bf16.msra.mxu0 0
    %161 = vmatprep.subr.bf16.mxu0 0
    %162 = vmatpush1.bf16.msra.mxu0 0
    %163 = vmatprep.subr.bf16.mxu0 0
    %164 = vmatpush1.bf16.msra.mxu0 0
    %165 = vmatprep.mubr.bf16.mxu0 0
    %166 = vmatmul.mubr.bf16.gmra.mrb[0].mxu0 %v81
    %v167 = vpop.f32.mrb[0].mxu0
    %v168 = vadd.f32 0.0, %v167
    %v169 = vpop.f32.mrb[0].mxu0
    %v170 = vpop.f32.mrb[0].mxu0
    %v171 = vpop.f32.mrb[0].mxu0
    %172 = vdwg.mxu0
    %173 = vmatprep.subr.bf16.mxu0 0
    %174 = vmatpush1.bf16.msra.mxu0 %v117
    %175 = vmatprep.subr.bf16.mxu0 0
    %176 = vmatpush1.bf16.msra.mxu0 %v118
    %177 = vmatprep.subr.bf16.mxu0 0
    %178 = vmatpush1.bf16.msra.mxu0 %v119
    %179 = vmatprep.subr.bf16.mxu0 0
    %180 = vmatpush1.bf16.msra.mxu0 %v120
    %181 = vmatprep.subr.bf16.mxu0 0
    %182 = vmatpush1.bf16.msra.mxu0 %v121
    %183 = vmatprep.subr.bf16.mxu0 0
    %184 = vmatpush1.bf16.msra.mxu0 %v122
    %185 = vmatprep.subr.bf16.mxu0 0
    %186 = vmatpush1.bf16.msra.mxu0 %v123
    %187 = vmatprep.subr.bf16.mxu0 0
    %188 = vmatpush1.bf16.msra.mxu0 %v124
    %189 = vmatprep.subr.bf16.mxu0 0
    %190 = vmatpush1.bf16.msra.mxu0 0
    %191 = vmatprep.subr.bf16.mxu0 0
    %192 = vmatpush1.bf16.msra.mxu0 0
    %193 = vmatprep.subr.bf16.mxu0 0
    %194 = vmatpush1.bf16.msra.mxu0 0
    %195 = vmatprep.subr.bf16.mxu0 0
    %196 = vmatpush1.bf16.msra.mxu0 0
    %197 = vmatprep.subr.bf16.mxu0 0
    %198 = vmatpush1.bf16.msra.mxu0 0
    %199 = vmatprep.subr.bf16.mxu0 0
    %200 = vmatpush1.bf16.msra.mxu0 0
    %201 = vmatprep.subr.bf16.mxu0 0
    %202 = vmatpush1.bf16.msra.mxu0 0
    %203 = vmatprep.subr.bf16.mxu0 0
    %204 = vmatpush1.bf16.msra.mxu0 0
    %205 = vmatprep.mubr.bf16.mxu0 0
    %206 = vmatmul.mubr.bf16.gmra.mrb[0].mxu0 %v78
    %v207 = vpop.f32.mrb[0].mxu0
    %v208 = vadd.f32 %v168, %v207
    %v209 = vpop.f32.mrb[0].mxu0
    %v210 = vpop.f32.mrb[0].mxu0
    %v211 = vpop.f32.mrb[0].mxu0
    %212 = vdwg.mxu0
    %213 = vmatprep.subr.bf16.mxu0 0
    %214 = vmatpush1.bf16.msra.mxu0 %v117
    %215 = vmatprep.subr.bf16.mxu0 0
    %216 = vmatpush1.bf16.msra.mxu0 %v118
    %217 = vmatprep.subr.bf16.mxu0 0
    %218 = vmatpush1.bf16.msra.mxu0 %v119
    %219 = vmatprep.subr.bf16.mxu0 0
    %220 = vmatpush1.bf16.msra.mxu0 %v120
    %221 = vmatprep.subr.bf16.mxu0 0
    %222 = vmatpush1.bf16.msra.mxu0 %v121
    %223 = vmatprep.subr.bf16.mxu0 0
    %224 = vmatpush1.bf16.msra.mxu0 %v122
    %225 = vmatprep.subr.bf16.mxu0 0
    %226 = vmatpush1.bf16.msra.mxu0 %v123
    %227 = vmatprep.subr.bf16.mxu0 0
    %228 = vmatpush1.bf16.msra.mxu0 %v124
    %229 = vmatprep.subr.bf16.mxu0 0
    %230 = vmatpush1.bf16.msra.mxu0 0
    %231 = vmatprep.subr.bf16.mxu0 0
    %232 = vmatpush1.bf16.msra.mxu0 0
    %233 = vmatprep.subr.bf16.mxu0 0
    %234 = vmatpush1.bf16.msra.mxu0 0
    %235 = vmatprep.subr.bf16.mxu0 0
    %236 = vmatpush1.bf16.msra.mxu0 0
    %237 = vmatprep.subr.bf16.mxu0 0
    %238 = vmatpush1.bf16.msra.mxu0 0
    %239 = vmatprep.subr.bf16.mxu0 0
    %240 = vmatpush1.bf16.msra.mxu0 0
    %241 = vmatprep.subr.bf16.mxu0 0
    %242 = vmatpush1.bf16.msra.mxu0 0
    %243 = vmatprep.subr.bf16.mxu0 0
    %244 = vmatpush1.bf16.msra.mxu0 0
    %245 = vmatprep.mubr.bf16.mxu0 0
    %246 = vmatmul.mubr.bf16.gmra.mrb[0].mxu0 %v84
    %v247 = vpop.f32.mrb[0].mxu0
    %v248 = vadd.f32 0.0, %v247
    %v249 = vpop.f32.mrb[0].mxu0
    %v250 = vpop.f32.mrb[0].mxu0
    %v251 = vpop.f32.mrb[0].mxu0
    %252 = vdwg.mxu0
    %v253 = vadd.f32 %v208, %v248
    %v254 = vsub.f32 %v61, %v253
    %v255 = vmul.f32 %v254, %v254
    %v256 = vpack.c.bf16 %v255, %v255
    %v257 = vunpack.c.l.bf16 %v256
    %v258 = vsub.f32 %v255, %v257
    %v259 = vpack.c.bf16 %v258, %v258
    %v260 = vunpack.c.l.bf16 %v259
    %v261 = vsub.f32 %v258, %v260
    %v262 = vpack.c.bf16 %v261, %v261
    %263 = vmatprep.subr.bf16.mxu0 0
    %264 = vmatpush1.bf16.msra.mxu0 %v117
    %265 = vmatprep.subr.bf16.mxu0 0
    %266 = vmatpush1.bf16.msra.mxu0 %v118
    %267 = vmatprep.subr.bf16.mxu0 0
    %268 = vmatpush1.bf16.msra.mxu0 %v119
    %269 = vmatprep.subr.bf16.mxu0 0
    %270 = vmatpush1.bf16.msra.mxu0 %v120
    %271 = vmatprep.subr.bf16.mxu0 0
    %272 = vmatpush1.bf16.msra.mxu0 %v121
    %273 = vmatprep.subr.bf16.mxu0 0
    %274 = vmatpush1.bf16.msra.mxu0 %v122
    %275 = vmatprep.subr.bf16.mxu0 0
    %276 = vmatpush1.bf16.msra.mxu0 %v123
    %277 = vmatprep.subr.bf16.mxu0 0
    %278 = vmatpush1.bf16.msra.mxu0 %v124
    %279 = vmatprep.subr.bf16.mxu0 0
    %280 = vmatpush1.bf16.msra.mxu0 0
    %281 = vmatprep.subr.bf16.mxu0 0
    %282 = vmatpush1.bf16.msra.mxu0 0
    %283 = vmatprep.subr.bf16.mxu0 0
    %284 = vmatpush1.bf16.msra.mxu0 0
    %285 = vmatprep.subr.bf16.mxu0 0
    %286 = vmatpush1.bf16.msra.mxu0 0
    %287 = vmatprep.subr.bf16.mxu0 0
    %288 = vmatpush1.bf16.msra.mxu0 0
    %289 = vmatprep.subr.bf16.mxu0 0
    %290 = vmatpush1.bf16.msra.mxu0 0
    %291 = vmatprep.subr.bf16.mxu0 0
    %292 = vmatpush1.bf16.msra.mxu0 0
    %293 = vmatprep.subr.bf16.mxu0 0
    %294 = vmatpush1.bf16.msra.mxu0 0
    %295 = vmatprep.mubr.bf16.mxu0 0
    %296 = vmatmul.mubr.bf16.gmra.mrb[0].mxu0 %v259
    %v297 = vpop.f32.mrb[0].mxu0
    %v298 = vadd.f32 0.0, %v297
    %v299 = vpop.f32.mrb[0].mxu0
    %v300 = vpop.f32.mrb[0].mxu0
    %v301 = vpop.f32.mrb[0].mxu0
    %302 = vdwg.mxu0
    %303 = vmatprep.subr.bf16.mxu0 0
    %304 = vmatpush1.bf16.msra.mxu0 %v117
    %305 = vmatprep.subr.bf16.mxu0 0
    %306 = vmatpush1.bf16.msra.mxu0 %v118
    %307 = vmatprep.subr.bf16.mxu0 0
    %308 = vmatpush1.bf16.msra.mxu0 %v119
    %309 = vmatprep.subr.bf16.mxu0 0
    %310 = vmatpush1.bf16.msra.mxu0 %v120
    %311 = vmatprep.subr.bf16.mxu0 0
    %312 = vmatpush1.bf16.msra.mxu0 %v121
    %313 = vmatprep.subr.bf16.mxu0 0
    %314 = vmatpush1.bf16.msra.mxu0 %v122
    %315 = vmatprep.subr.bf16.mxu0 0
    %316 = vmatpush1.bf16.msra.mxu0 %v123
    %317 = vmatprep.subr.bf16.mxu0 0
    %318 = vmatpush1.bf16.msra.mxu0 %v124
    %319 = vmatprep.subr.bf16.mxu0 0
    %320 = vmatpush1.bf16.msra.mxu0 0
    %321 = vmatprep.subr.bf16.mxu0 0
    %322 = vmatpush1.bf16.msra.mxu0 0
    %323 = vmatprep.subr.bf16.mxu0 0
    %324 = vmatpush1.bf16.msra.mxu0 0
    %325 = vmatprep.subr.bf16.mxu0 0
    %326 = vmatpush1.bf16.msra.mxu0 0
    %327 = vmatprep.subr.bf16.mxu0 0
    %328 = vmatpush1.bf16.msra.mxu0 0
    %329 = vmatprep.subr.bf16.mxu0 0
    %330 = vmatpush1.bf16.msra.mxu0 0
    %331 = vmatprep.subr.bf16.mxu0 0
    %332 = vmatpush1.bf16.msra.mxu0 0
    %333 = vmatprep.subr.bf16.mxu0 0
    %334 = vmatpush1.bf16.msra.mxu0 0
    %335 = vmatprep.mubr.bf16.mxu0 0
    %336 = vmatmul.mubr.bf16.gmra.mrb[0].mxu0 %v256
    %v337 = vpop.f32.mrb[0].mxu0
    %v338 = vadd.f32 %v298, %v337
    %v339 = vpop.f32.mrb[0].mxu0
    %v340 = vpop.f32.mrb[0].mxu0
    %v341 = vpop.f32.mrb[0].mxu0
    %342 = vdwg.mxu0
    %343 = vmatprep.subr.bf16.mxu0 0
    %344 = vmatpush1.bf16.msra.mxu0 %v117
    %345 = vmatprep.subr.bf16.mxu0 0
    %346 = vmatpush1.bf16.msra.mxu0 %v118
    %347 = vmatprep.subr.bf16.mxu0 0
    %348 = vmatpush1.bf16.msra.mxu0 %v119
    %349 = vmatprep.subr.bf16.mxu0 0
    %350 = vmatpush1.bf16.msra.mxu0 %v120
    %351 = vmatprep.subr.bf16.mxu0 0
    %352 = vmatpush1.bf16.msra.mxu0 %v121
    %353 = vmatprep.subr.bf16.mxu0 0
    %354 = vmatpush1.bf16.msra.mxu0 %v122
    %355 = vmatprep.subr.bf16.mxu0 0
    %356 = vmatpush1.bf16.msra.mxu0 %v123
    %357 = vmatprep.subr.bf16.mxu0 0
    %358 = vmatpush1.bf16.msra.mxu0 %v124
    %359 = vmatprep.subr.bf16.mxu0 0
    %360 = vmatpush1.bf16.msra.mxu0 0
    %361 = vmatprep.subr.bf16.mxu0 0
    %362 = vmatpush1.bf16.msra.mxu0 0
    %363 = vmatprep.subr.bf16.mxu0 0
    %364 = vmatpush1.bf16.msra.mxu0 0
    %365 = vmatprep.subr.bf16.mxu0 0
    %366 = vmatpush1.bf16.msra.mxu0 0
    %367 = vmatprep.subr.bf16.mxu0 0
    %368 = vmatpush1.bf16.msra.mxu0 0
    %369 = vmatprep.subr.bf16.mxu0 0
    %370 = vmatpush1.bf16.msra.mxu0 0
    %371 = vmatprep.subr.bf16.mxu0 0
    %372 = vmatpush1.bf16.msra.mxu0 0
    %373 = vmatprep.subr.bf16.mxu0 0
    %374 = vmatpush1.bf16.msra.mxu0 0
    %375 = vmatprep.mubr.bf16.mxu0 0
    %376 = vmatmul.mubr.bf16.gmra.mrb[0].mxu0 %v262
    %v377 = vpop.f32.mrb[0].mxu0
    %v378 = vadd.f32 0.0, %v377
    %v379 = vpop.f32.mrb[0].mxu0
    %v380 = vpop.f32.mrb[0].mxu0
    %v381 = vpop.f32.mrb[0].mxu0
    %382 = vdwg.mxu0
    %v383 = vadd.f32 %v338, %v378
    %v384 = vadd.f32 %v383, 1e-05
    %v385 = vrsqrt.pop %v384
    %v386 = vmul.f32 %v254, %v385
    %v387 = vld [vmem:[%s2] sm:$0x1]
    %v389 = vlaneseq
    %v390 = vshrl.u32 %v389, 7
    %v391 = vsub.s32 0, %v390
    %v392 = vrot.slane %v387, %v391
    %v394 = vmul.f32 %v386, %v392
    %v395 = vld [vmem:[%s3] sm:$0x1]
    %v397 = vlaneseq
    %v398 = vshrl.u32 %v397, 7
    %v399 = vsub.s32 0, %v398
    %v400 = vrot.slane %v395, %v399
    %v402 = vadd.f32 %v394, %v400
    %403 = vst [vmem:[#allocation8] sm:$0xf] %v402
    // Predicated region
    $region34: #{tpu_custom_call.1} parent=1 // pred_check
      _
    $region35: #{tpu_custom_call.1} parent=1 // pred_check_branch
      %405 = sbr.rel (0) target = $region37
    $region36: #{tpu_custom_call.1} parent=1 // pred_region
      %s407 = ssub.s32 64, 64
      %408 = vsyncadd [#allocation4], %s407
      %s410 = sshll.u32 [#allocation8], 4
      %s411 = int_to_ptr.vmem [resolvable:$true] %s410
      %413 = dma.vmem_to_hbm [thread:$0]  %s411, 64, %s5, [#allocation4]
    $region37: #{tpu_custom_call.1} parent=1 // pred_fallthru
      _
    // Predicated region
    $region38: #{tpu_custom_call.1} parent=1 // pred_check
      _
    $region39: #{tpu_custom_call.1} parent=1 // pred_check_branch
      %415 = sbr.rel (0) target = $region41
    $region40: #{tpu_custom_call.1} parent=1 // pred_region
      %416 = dma.done [#allocation4], 64
    $region41: #{tpu_custom_call.1} parent=1 // pred_fallthru
      _
    %417 = vsyncpa [#allocation3], 1
    %418 = vsyncpa [#allocation6], 1
    %419 = vsyncpa [#allocation4], 1

</llo_original>
